<compile_context>
chip_gen: v5e
topology: v5e:2x2
jax: 0.10.0
libtpu: 0.0.40
codegen_flags: <defaults>
</compile_context>

<pallas_src>
import jax
import jax.numpy as jnp
from jax.experimental import pallas as pl
from jax.experimental.pallas import tpu as pltpu


def _round_up(x: int, m: int) -> int:
    return (x + m - 1) // m * m


def _ncr_xui_kernel(gu_ref, gi_ref, out_ref, acc_ref):
    """grid = (batch tiles of gamma_u [parallel], batch tiles of gamma_i [arbitrary]).

    acc_ref: (1, K_pad) f32 VMEM scratch holding the running column-sum of
    gamma_i. The xui tile is written once, at the last reduction step.
    """
    j = pl.program_id(1)

    @pl.when(j == 0)
    def _init():
        acc_ref[...] = jnp.zeros_like(acc_ref)

    # Column-sum of the current gamma_i tile: (tb, K_pad) -> (1, K_pad).
    # O(B*K) adds per user-tile instead of the original O(TB*B*K) multiply+reduce,
    # and no (TB, B, K) intermediate ever exists.
    acc_ref[...] += jnp.sum(gi_ref[...], axis=0, keepdims=True)

    @pl.when(j == pl.num_programs(1) - 1)
    def _finalize():
        # xui[b, k] = gamma_u[b, k] * sum_j gamma_i[j, k]
        out_ref[...] = gu_ref[...] * acc_ref[...]


def ncr_forward(Gu, Gi, users, items, *, tb=None):
    """Pallas implementation of NCRModel.forward((users, items))."""
    # Embedding gathers (XLA glue). gamma_u / gamma_i are *returned* by forward(),
    # so they must be materialized in HBM regardless.
    # TODO(synk): fully fusing these gathers into the kernel (scalar-prefetched
    # users/items + per-row pltpu.make_async_copy from HBM refs) would save one
    # re-read of gamma_u/gamma_i and two XLA gather launches; kept as glue here.
    gamma_u = Gu[users].astype(jnp.float32)      # (B, K)
    gamma_i = Gi[items].astype(jnp.float32)      # (B, K)
    B, K = gamma_u.shape

    # ---- lane/sublane-aligned kernel layout --------------------------------
    K_pad = _round_up(K, 128)                    # lane-dense, unmasked full-width stores
    B8 = _round_up(B, 8)
    if tb is None:
        tb = 512                                 # 256-1024 row tiles ~ HBM roofline
    tb = min(_round_up(tb, 8), B8)
    while B8 % tb:                               # keep the grid exact (padding < 8 rows)
        tb -= 8
    B_pad = B8
    nb = B_pad // tb

    # Zero padding is benign: padded gamma_i rows/cols add 0 to the column-sum,
    # padded gamma_u rows/cols are sliced off below.
    gu_p = jnp.pad(gamma_u, ((0, B_pad - B), (0, K_pad - K)))
    gi_p = jnp.pad(gamma_i, ((0, B_pad - B), (0, K_pad - K)))

    # Note: the column-sum is recomputed per user-tile (grid axis 1 restarts for
    # each i). For very large B one would hoist it into its own single-pass
    # kernel; at typical NCR batch sizes the redundant adds are negligible.
    xui_p = pl.pallas_call(
        _ncr_xui_kernel,
        out_shape=jax.ShapeDtypeStruct((B_pad, K_pad), jnp.float32),
        grid_spec=pltpu.PrefetchScalarGridSpec(
            num_scalar_prefetch=0,
            grid=(nb, nb),
            in_specs=[
                pl.BlockSpec((tb, K_pad), lambda i, j: (i, 0)),  # gamma_u tile (parallel)
                pl.BlockSpec((tb, K_pad), lambda i, j: (j, 0)),  # gamma_i tile (reduction)
            ],
            out_specs=pl.BlockSpec((tb, K_pad), lambda i, j: (i, 0)),
            scratch_shapes=[pltpu.VMEM((1, K_pad), jnp.float32)],
        ),
        compiler_params=pltpu.CompilerParams(
            # Batch axis parallel (dual-TC chips split it); reduction axis arbitrary.
            dimension_semantics=("parallel", "arbitrary"),
            # Explicit scoped-VMEM budget: above v5e's 16 MiB default, within
            # v7x's 64 MiB physical VMEM.
            vmem_limit_bytes=64 * 1024 * 1024,
        ),
    )(gu_p, gi_p)

    xui = xui_p[:B, :K]
    # Match torch return shapes: gamma_u is (B, 1, K), gamma_i is (B, K).
    return xui, gamma_u.reshape(B, 1, K), gamma_i


def init_params(key, num_users, num_items, embed_k):
    """Deterministic parameter init mirroring NCRModel.__init__ shapes.

    Gu: (num_users, K) xavier-uniform; Gi: (num_items, K) xavier-uniform;
    `true`: (K,) uniform[0, 0.1) (unused by forward).
    """
    k1, k2, k3 = jax.random.split(key, 3)
    a_u = (6.0 / (num_users + embed_k)) ** 0.5
    a_i = (6.0 / (num_items + embed_k)) ** 0.5
    Gu = jax.random.uniform(k1, (num_users, embed_k), jnp.float32, -a_u, a_u)
    Gi = jax.random.uniform(k2, (num_items, embed_k), jnp.float32, -a_i, a_i)
    true_vec = jax.random.uniform(k3, (embed_k,), jnp.float32, 0.0, 0.1)
    # TODO(synk): LogicNot / LogicOr submodules are referenced in __init__ but
    # never defined in the provided source and are not used in forward(); skipped.
    return Gu, Gi, true_vec


if __name__ == "__main__":
    # Small, deterministic shapes. batch=30 (not a multiple of 8) and embed_k=32
    # (< 128 lanes) deliberately exercise the padding / lane-densification path;
    # tb=8 exercises a real (4, 4) grid with pipelining + accumulation.
    num_users, num_items, embed_k, batch = 64, 96, 32, 30

    key = jax.random.PRNGKey(0)
    kp, ku, ki = jax.random.split(key, 3)
    Gu, Gi, _ = init_params(kp, num_users, num_items, embed_k)
    users = jax.random.randint(ku, (batch,), 0, num_users, dtype=jnp.int32)
    items = jax.random.randint(ki, (batch,), 0, num_items, dtype=jnp.int32)

    fwd = jax.jit(ncr_forward, static_argnames=("tb",))
    xui, gamma_u, gamma_i = fwd(Gu, Gi, users, items, tb=8)
    jax.block_until_ready((xui, gamma_u, gamma_i))

    # Pure-JAX reference of the exact torch broadcast semantics:
    # (B,1,K) * (1,B,K) -> (B,B,K), sum over dim 1.
    gu_ref = Gu[users].reshape(batch, 1, embed_k)
    gi_ref = Gi[items]
    xui_ref = jnp.sum(gu_ref * gi_ref[None, :, :], axis=1)

    assert xui.shape == (batch, embed_k)
    assert gamma_u.shape == (batch, 1, embed_k)
    assert gamma_i.shape == (batch, embed_k)
    assert jnp.allclose(xui, xui_ref, rtol=1e-5, atol=1e-5)
    assert jnp.allclose(gamma_u[:, 0, :], Gu[users], rtol=0, atol=0)
    assert jnp.allclose(gamma_i, Gi[items], rtol=0, atol=0)

    print("KERNEL_OK")
</pallas_src>

<mosaic_0001>
module attributes {stable_mosaic.version = 11 : i64} {
  func.func @_ncr_xui_kernel(%arg0: i32, %arg1: i32, %arg2: memref<8x128xf32, #tpu.memory_space<vmem>>, %arg3: memref<8x128xf32, #tpu.memory_space<vmem>>, %arg4: memref<8x128xf32, #tpu.memory_space<vmem>>, %arg5: memref<1x128xf32, #tpu.memory_space<vmem>>) attributes {dimension_semantics = [#tpu.dimension_semantics<parallel>, #tpu.dimension_semantics<arbitrary>], iteration_bounds = array<i64: 4, 4>, scalar_prefetch = 0 : i64, scratch_operands = 1 : i64, tpu.core_type = #tpu.core_type<tc>, window_params = [{transform_indices = @transform_0, window_bounds = array<i64: 8, 128>}, {transform_indices = @transform_1, window_bounds = array<i64: 8, 128>}, {transform_indices = @transform_2, window_bounds = array<i64: 8, 128>}]} {
    %c0_i32 = arith.constant 0 : i32
    %0 = arith.cmpi eq, %arg1, %c0_i32 : i32
    %1 = arith.extui %0 : i1 to i32
    %c0_i32_0 = arith.constant 0 : i32
    %2 = arith.cmpi ne, %1, %c0_i32_0 : i32
    scf.if %2 {
      %cst_7 = arith.constant 0.000000e+00 : f32
      %12 = vector.broadcast %cst_7 : f32 to vector<1x128xf32>
      %c0_8 = arith.constant 0 : index
      %c0_9 = arith.constant 0 : index
      %13 = vector.load %arg5[%c0_8, %c0_9] : memref<1x128xf32, #tpu.memory_space<vmem>>, vector<1x128xf32>
      tpu.vector_store %arg5[%c0_8, %c0_9], %12 {strides = array<i32>} : memref<1x128xf32, #tpu.memory_space<vmem>>, vector<1x128xf32>,
    } else {
    }
    %c0 = arith.constant 0 : index
    %c0_1 = arith.constant 0 : index
    %3 = vector.load %arg5[%c0, %c0_1] : memref<1x128xf32, #tpu.memory_space<vmem>>, vector<1x128xf32>
    %c0_2 = arith.constant 0 : index
    %c0_3 = arith.constant 0 : index
    %4 = vector.load %arg3[%c0_2, %c0_3] : memref<8x128xf32, #tpu.memory_space<vmem>>, vector<8x128xf32>
    %cst = arith.constant dense<0.000000e+00> : vector<128xf32>
    %5 = vector.multi_reduction <add>, %4, %cst [0] : vector<8x128xf32> to vector<128xf32>
    %6 = vector.shape_cast %5 : vector<128xf32> to vector<1x128xf32>
    %7 = arith.addf %3, %6 : vector<1x128xf32>
    %c0_4 = arith.constant 0 : index
    %c0_5 = arith.constant 0 : index
    %8 = vector.load %arg5[%c0_4, %c0_5] : memref<1x128xf32, #tpu.memory_space<vmem>>, vector<1x128xf32>
    tpu.vector_store %arg5[%c0_4, %c0_5], %7 {strides = array<i32>} : memref<1x128xf32, #tpu.memory_space<vmem>>, vector<1x128xf32>,
    %c3_i32 = arith.constant 3 : i32
    %9 = arith.cmpi eq, %arg1, %c3_i32 : i32
    %10 = arith.extui %9 : i1 to i32
    %c0_i32_6 = arith.constant 0 : i32
    %11 = arith.cmpi ne, %10, %c0_i32_6 : i32
    scf.if %11 {
      %c0_7 = arith.constant 0 : index
      %c0_8 = arith.constant 0 : index
      %12 = vector.load %arg2[%c0_7, %c0_8] : memref<8x128xf32, #tpu.memory_space<vmem>>, vector<8x128xf32>
      %c0_9 = arith.constant 0 : index
      %c0_10 = arith.constant 0 : index
      %13 = vector.load %arg5[%c0_9, %c0_10] : memref<1x128xf32, #tpu.memory_space<vmem>>, vector<1x128xf32>
      %14 = vector.broadcast %13 : vector<1x128xf32> to vector<8x128xf32>
      %15 = arith.mulf %12, %14 : vector<8x128xf32>
      %c0_11 = arith.constant 0 : index
      %c0_12 = arith.constant 0 : index
      %16 = vector.load %arg4[%c0_11, %c0_12] : memref<8x128xf32, #tpu.memory_space<vmem>>, vector<8x128xf32>
      tpu.vector_store %arg4[%c0_11, %c0_12], %15 {strides = array<i32>} : memref<8x128xf32, #tpu.memory_space<vmem>>, vector<8x128xf32>,
    } else {
    }
    return
  }
  func.func @transform_0(%arg0: i32, %arg1: i32) -> (i32, i32) {
    %c0_i32 = arith.constant 0 : i32
    %c0_i32_0 = arith.constant 0 : i32
    return %arg0, %c0_i32 : i32, i32
  }
  func.func @transform_1(%arg0: i32, %arg1: i32) -> (i32, i32) {
    %c0_i32 = arith.constant 0 : i32
    %c0_i32_0 = arith.constant 0 : i32
    return %arg1, %c0_i32 : i32, i32
  }
  func.func @transform_2(%arg0: i32, %arg1: i32) -> (i32, i32) {
    %c0_i32 = arith.constant 0 : i32
    %c0_i32_0 = arith.constant 0 : i32
    return %arg0, %c0_i32 : i32, i32
  }
}

</mosaic_0001>

<llo_original>
// kernel: ncr_forward.1
$region0: #{ncr_forward.1}
  #allocation0 [shape = 'u32[]', space=smem, size = 0x4, offset = 0x4, fixed_abs, tag = 'smem constant byte address 0x4 - core index']
  #allocation1 [shape = 'u32[72,128]{1,0:T(1,128)}', space=vmem, size = 0x9000, scoped, tag = 'internal scratch']
  #allocation2 [shape = 'f32[1,128]{1,0:T(1,128)}', space=vmem, size = 0x200, scoped, tag = 'scratch operand']
  %s0 = inlined_call_operand.vmem [shape: f32[32,128], index: 0, kind: input, shape index: {}]
  %s1 = inlined_call_operand.vmem [shape: f32[32,128], index: 1, kind: input, shape index: {}]
  %s2 = inlined_call_operand.hbm [shape: f32[32,128], index: 2, kind: output, shape index: {}]
  %s3 = sld [smem:[#allocation0]]
  $region49: #{ncr_forward.1} parent=0
    _
  %s5 = ssub.s32 1, %s3
  %s6 = scalar_select 0, %s5, %s3
  $region1: #{ncr_forward.1} parent=0
    #allocation3 [shape = 'u8[8192]{0}', space=vmem, size = 0x2000, scoped, tag = 'output window, operand 0']
    #allocation4 [shape = 's32[2]{0}', space=sflag, size = 0x8, scoped, tag = 'scoped memory for ncr_forward.1']
    %7 = vsyncpa [#allocation4], 0
    %s8 = scalar_lea.sflag [#allocation4], 1
    %9 = vsyncpa %s8, 0
    loop: start=0, step=1, limit=18
    $region2: #{ncr_forward.1} parent=1 // loop_pre_header
      _
    $region3: #{ncr_forward.1} parent=1 // loop_header
      %s11 = sphi 0, %s15
      %p12 = scmp.ge.s32.totalorder %s11, 18
      %s18 = sphi 0, %s30
      %s19 = sphi 0, %s26
      %s20 = sphi 0, %s18
      %s21 = sphi 0, %s19
      %s22 = sphi 0, %s20
      %s23 = sphi 0, %s21
      %s33 = sphi 0, %s35
      %s36 = sphi 0, %s33
      %s37 = sphi 0, %s36
      %s53 = sphi 0, %s37
      %s59 = sphi 0, %s61
      %s62 = sphi 0, %s59
      %s63 = sphi 0, %s62
      %s79 = sphi 0, %s63
      %s85 = sphi 0, %s87
      %s88 = sphi 0, %s85
      %s89 = sphi 0, %s88
      %s105 = sphi 0, %s89
    $region4: #{ncr_forward.1} parent=1 // loop_header_branch
      %14 = sbr.rel (%p12) target = $region8
    $region5: #{ncr_forward.1} parent=1 // loop_body
      %s16 = ssub.s32 %s11, 1
      %s17 = ssub.s32 %s11, 2
      %s24 = sadd.s32 1, %s19
      %p25 = scmp.ge.s32.totalorder %s24, 4
      %s26 = scalar_select %p25, 0, %s24
      %s27 = sadd.s32 1, %s18
      %s28 = scalar_select %p25, %s27, %s18
      %p29 = scmp.ge.s32.totalorder %s28, 4
      %s30 = scalar_select %p29, 0, %s28
      %s31 = ssub.s32 %s18, %s30
      %p32 = scmp.eq.s32.totalorder %s31, 0
      %s34 = sadd.s32 %s33, 1
      %s35 = scalar_select %p32, %s33, %s34
      %p38 = pneg %p32
      %p39 = scmp.eq.s32.totalorder %s11, 15
      %p40 = por %p38, %p39
      %p41 = scmp.ne.s32.totalorder %s33, %s36
      %p42 = scmp.eq.s32.totalorder %s11, 0
      %p43 = por %p41, %p42
      %p44 = scmp.ne.s32.totalorder %s33, %s36
      %p45 = scmp.eq.s32.totalorder %s16, 15
      %p46 = por %p44, %p45
      %p47 = scmp.ne.s32.totalorder %s36, %s37
      %p48 = scmp.eq.s32.totalorder %s16, 0
      %p49 = por %p47, %p48
      %p50 = scmp.ne.s32.totalorder %s36, %s37
      %p51 = scmp.eq.s32.totalorder %s17, 15
      %p52 = por %p50, %p51
      %p54 = scmp.ne.s32.totalorder %s37, %s53
      %p55 = scmp.eq.s32.totalorder %s17, 0
      %p56 = por %p54, %p55
      %s57 = ssub.s32 %s19, %s26
      %p58 = scmp.eq.s32.totalorder %s57, 0
      %s60 = sadd.s32 %s59, 1
      %s61 = scalar_select %p58, %s59, %s60
      %p64 = pneg %p58
      %p65 = scmp.eq.s32.totalorder %s11, 15
      %p66 = por %p64, %p65
      %p67 = scmp.ne.s32.totalorder %s59, %s62
      %p68 = scmp.eq.s32.totalorder %s11, 0
      %p69 = por %p67, %p68
      %p70 = scmp.ne.s32.totalorder %s59, %s62
      %p71 = scmp.eq.s32.totalorder %s16, 15
      %p72 = por %p70, %p71
      %p73 = scmp.ne.s32.totalorder %s62, %s63
      %p74 = scmp.eq.s32.totalorder %s16, 0
      %p75 = por %p73, %p74
      %p76 = scmp.ne.s32.totalorder %s62, %s63
      %p77 = scmp.eq.s32.totalorder %s17, 15
      %p78 = por %p76, %p77
      %p80 = scmp.ne.s32.totalorder %s63, %s79
      %p81 = scmp.eq.s32.totalorder %s17, 0
      %p82 = por %p80, %p81
      %s83 = ssub.s32 %s18, %s30
      %p84 = scmp.eq.s32.totalorder %s83, 0
      %s86 = sadd.s32 %s85, 1
      %s87 = scalar_select %p84, %s85, %s86
      %p90 = pneg %p84
      %p91 = scmp.eq.s32.totalorder %s11, 15
      %p92 = por %p90, %p91
      %p93 = scmp.ne.s32.totalorder %s85, %s88
      %p94 = scmp.eq.s32.totalorder %s11, 0
      %p95 = por %p93, %p94
      %p96 = scmp.ne.s32.totalorder %s85, %s88
      %p97 = scmp.eq.s32.totalorder %s16, 15
      %p98 = por %p96, %p97
      %p99 = scmp.ne.s32.totalorder %s88, %s89
      %p100 = scmp.eq.s32.totalorder %s16, 0
      %p101 = por %p99, %p100
      %p102 = scmp.ne.s32.totalorder %s88, %s89
      %p103 = scmp.eq.s32.totalorder %s17, 15
      %p104 = por %p102, %p103
      %p106 = scmp.ne.s32.totalorder %s89, %s105
      %p107 = scmp.eq.s32.totalorder %s17, 0
      %p108 = por %p106, %p107
      %p109 = scmp.le.s32.totalorder 1, %s11
      %p110 = scmp.lt.s32.totalorder %s11, 17
      %p111 = pnand %p109, %p110
      %p112 = pneg %p111
      // Predicated region
      $region9: #{ncr_forward.1} parent=5 // pred_check
        _
      $region10: #{ncr_forward.1} parent=5 // pred_check_branch
        %114 = sbr.rel (%p111) target = $region12
      $region11: #{ncr_forward.1} parent=5 // pred_region
        %s115 = ssub.s32 %s11, 1
      $region12: #{ncr_forward.1} parent=5 // pred_fallthru
        _
      %p116 = scmp.lt.s32.totalorder %s11, 16
      // Predicated region
      $region13: #{ncr_forward.1} parent=5 // pred_check
        %p117 = pneg %p116
      $region14: #{ncr_forward.1} parent=5 // pred_check_branch
        %119 = sbr.rel (%p117) target = $region16
      $region15: #{ncr_forward.1} parent=5 // pred_region
        // Predicated region
        $region17: #{ncr_forward.1} parent=15 // pred_check
          %p120 = pneg %p43
        $region18: #{ncr_forward.1} parent=15 // pred_check_branch
          %122 = sbr.rel (%p120) target = $region20
        $region19: #{ncr_forward.1} parent=15 // pred_region
          %p123 = scmp.lt.s32.totalorder %s18, 3
          %s124 = scalar_select %p123, %s18, 3
          %s125 = smul.addr %s124, 8
          %s126 = scalar_lea.vmem %s0, %s125
        $region20: #{ncr_forward.1} parent=15 // pred_fallthru
          _
        // Predicated region
        $region21: #{ncr_forward.1} parent=15 // pred_check
          %p127 = pneg %p69
        $region22: #{ncr_forward.1} parent=15 // pred_check_branch
          %129 = sbr.rel (%p127) target = $region24
        $region23: #{ncr_forward.1} parent=15 // pred_region
          %p130 = scmp.lt.s32.totalorder %s19, 3
          %s131 = scalar_select %p130, %s19, 3
          %s132 = smul.addr %s131, 8
          %s133 = scalar_lea.vmem %s1, %s132
        $region24: #{ncr_forward.1} parent=15 // pred_fallthru
          _
      $region16: #{ncr_forward.1} parent=5 // pred_fallthru
        _
      %p134 = scmp.le.s32.totalorder 1, %s11
      %p135 = scmp.lt.s32.totalorder %s11, 17
      %p136 = pnand %p134, %p135
      %p137 = pneg %p136
      // Predicated region
      $region25: #{ncr_forward.1} parent=5 // pred_check
        _
      $region26: #{ncr_forward.1} parent=5 // pred_check_branch
        %139 = sbr.rel (%p136) target = $region28
      $region27: #{ncr_forward.1} parent=5 // pred_region
        %s140 = ssub.s32 %s11, 1
        %p141 = scmp.lt.s32.totalorder %s20, 3
        %s142 = scalar_select %p141, %s20, 3
        %s143 = smul.addr %s142, 8
        %s144 = scalar_lea.vmem %s0, %s143
        %p145 = pneg %p49
        %p146 = pneg %p46
        %p147 = scmp.lt.s32.totalorder %s21, 3
        %s148 = scalar_select %p147, %s21, 3
        %s149 = smul.addr %s148, 8
        %s150 = scalar_lea.vmem %s1, %s149
        %p151 = pneg %p75
        %p152 = pneg %p72
        %p153 = pneg %p101
        %p154 = pneg %p98
        %s155 = sand.u32 %s88, 1
        %s156 = scalar_lea.sflag [#allocation4], %s155
        %s157 = sand.u32 %s88, 1
        %s158 = smul.addr %s157, 8
        %s159 = scalar_lea.vmem [#allocation3], %s158
        %p160 = scmp.lt.s32.totalorder %s20, 3
        %s161 = scalar_select %p160, %s20, 3
        %s162 = smul.addr %s161, 8
        %s163 = scalar_lea.vmem %s0, %s162
        %p164 = scmp.lt.s32.totalorder %s21, 3
        %s165 = scalar_select %p164, %s21, 3
        %s166 = smul.addr %s165, 8
        %s167 = scalar_lea.vmem %s1, %s166
        %p168 = scmp.eq.s32.totalorder %s21, 0
        // Predicated region
        $region29: #{ncr_forward.1} parent=27 // pred_check
          %p169 = pneg %p168
        $region30: #{ncr_forward.1} parent=27 // pred_check_branch
          %171 = sbr.rel (%p169) target = $region32
        $region31: #{ncr_forward.1} parent=27 // pred_region
          %172 = vst [vmem:[#allocation2] sm:$0x1] 0.0
        $region32: #{ncr_forward.1} parent=27 // pred_fallthru
          _
        %v173 = vld [vmem:[#allocation2] sm:$0x1]
        %v174 = vld [vmem:[%s167] sm:$0xff]
        %v175 = vrot.slane %v174, 4
        %v176 = vadd.f32 %v174, %v175
        %v177 = vrot.slane %v176, 2
        %v178 = vadd.f32 %v176, %v177
        %v179 = vrot.slane %v178, 1
        %v180 = vadd.f32 %v178, %v179
        %v181 = vadd.f32 %v173, %v180
        %182 = vst [vmem:[#allocation2] sm:$0x1] %v181
        %p183 = scmp.eq.s32.totalorder %s21, 3
        // Predicated region
        $region33: #{ncr_forward.1} parent=27 // pred_check
          %p184 = pneg %p183
        $region34: #{ncr_forward.1} parent=27 // pred_check_branch
          %186 = sbr.rel (%p184) target = $region36
        $region35: #{ncr_forward.1} parent=27 // pred_region
          %v187 = vld [vmem:[%s163] sm:$0xff]
          %v188 = vld [vmem:[#allocation2] sm:$0x1]
          %v190 = vperm.slane %v188, 0
          %v192 = vmul.f32 %v187, %v190
          %193 = vst [vmem:[%s159] sm:$0xff] %v192
        $region36: #{ncr_forward.1} parent=27 // pred_fallthru
          _
        %s194 = sand.u32 %s88, 1
        %s195 = scalar_lea.sflag [#allocation4], %s194
        %s196 = sand.u32 %s88, 1
        %s197 = smul.addr %s196, 8
        %s198 = scalar_lea.vmem [#allocation3], %s197
        // Predicated region
        $region37: #{ncr_forward.1} parent=27 // pred_check
          %p199 = pneg %p98
        $region38: #{ncr_forward.1} parent=27 // pred_check_branch
          %201 = sbr.rel (%p199) target = $region40
        $region39: #{ncr_forward.1} parent=27 // pred_region
          %203 = vsyncadd %s195, 0
          %s204 = smul.addr %s20, 8
          %s205 = scalar_lea.hbm %s2, %s204
          %s207 = sshll.u32 %s198, 4
          %s208 = int_to_ptr.vmem [resolvable:$true] %s207
          %s209 = sshll.u32 %s205, 4
          %s210 = int_to_ptr.hbm [resolvable:$true] %s209
          %212 = dma.vmem_to_hbm [thread:$0]  %s208, 128, %s210, %s195
        $region40: #{ncr_forward.1} parent=27 // pred_fallthru
          _
      $region28: #{ncr_forward.1} parent=5 // pred_fallthru
        _
      %p213 = scmp.le.s32.totalorder 2, %s11
      // Predicated region
      $region41: #{ncr_forward.1} parent=5 // pred_check
        %p214 = pneg %p213
      $region42: #{ncr_forward.1} parent=5 // pred_check_branch
        %216 = sbr.rel (%p214) target = $region44
      $region43: #{ncr_forward.1} parent=5 // pred_region
        %s217 = ssub.s32 %s11, 2
        // Predicated region
        $region45: #{ncr_forward.1} parent=43 // pred_check
          %p218 = pneg %p104
        $region46: #{ncr_forward.1} parent=43 // pred_check_branch
          %220 = sbr.rel (%p218) target = $region48
        $region47: #{ncr_forward.1} parent=43 // pred_region
          %s221 = sand.u32 %s89, 1
          %s222 = scalar_lea.sflag [#allocation4], %s221
          %s223 = sand.u32 %s89, 1
          %s224 = smul.addr %s223, 8
          %s225 = scalar_lea.vmem [#allocation3], %s224
          %227 = dma.done %s222, 128
        $region48: #{ncr_forward.1} parent=43 // pred_fallthru
          _
      $region44: #{ncr_forward.1} parent=5 // pred_fallthru
        _
    $region6: #{ncr_forward.1} parent=1 // loop_footer
      %s15 = sadd.s32 1, %s11
    $region7: #{ncr_forward.1} parent=1 // loop_footer_branch
      %10 = sbr.rel target = $region3
    $region8: #{ncr_forward.1} parent=1 // loop_exit
      _
    %228 = vsyncpa [#allocation4], 1
    %s229 = scalar_lea.sflag [#allocation4], 1
    %230 = vsyncpa %s229, 1

</llo_original>
